<compile_context>
chip_gen: v7x
topology: tpu7x:2x2x1
jax: 0.10.0
libtpu: 0.0.40
codegen_flags: <defaults>
</compile_context>

<pallas_src>
import jax
import jax.numpy as jnp
from jax.experimental import pallas as pl
from jax.experimental.pallas import tpu as pltpu

# ---------------------------------------------------------------------------
# small config (patch_size=4, hidden_dim=D=32 — consistent with the module)
# ---------------------------------------------------------------------------
B, C, H, W = 2, 4, 16, 16
P = 4                      # patch_size
D = 32                     # hidden_dim
DH = 2 * D                 # tokens/channels mlp dim
HP, WP = H // P, W // P
N = HP * WP                # tokens per image
M = B * N                  # total tokens
CPP = C * P * P            # flattened patch length

_INV_SQRT2 = 0.7071067811865475


def _erf(z):
  # Abramowitz & Stegun 7.1.26 rational approximation, |abs err| <= 1.5e-7.
  # Exact divide (NOT pl.reciprocal(approx=True)) — required for parity with
  # PyTorch's exact-erf GELU; one VALU divide on a tiny tile is negligible.
  a1, a2, a3, a4, a5 = (0.254829592, -0.284496736, 1.421413741,
                        -1.453152027, 1.061405429)
  p = 0.3275911
  s = jnp.where(z >= 0.0, 1.0, -1.0)
  az = jnp.abs(z)
  t = 1.0 / (1.0 + p * az)
  poly = ((((a5 * t + a4) * t + a3) * t + a2) * t + a1) * t
  return s * (1.0 - poly * jnp.exp(-az * az))


def _gelu_exact(x):
  # PyTorch nn.GELU() default (erf-based, not tanh approximation).
  return 0.5 * x * (1.0 + _erf(x * _INV_SQRT2))


def _mixer_mlp(x, g, be, w1, b1, w2, b2):
  # LayerNorm over hidden dim (eps=1e-5, biased variance -> PyTorch semantics)
  mu = jnp.mean(x, axis=-1, keepdims=True)
  var = jnp.mean((x - mu) * (x - mu), axis=-1, keepdims=True)
  xn = (x - mu) * jax.lax.rsqrt(var + 1e-5)
  xn = xn * g + be
  h = jnp.dot(xn, w1, preferred_element_type=jnp.float32) + b1
  h = _gelu_exact(h)
  return jnp.dot(h, w2, preferred_element_type=jnp.float32) + b2


# ---------------------------------------------------------------------------
# Fused kernel: patch embed (as matmul) + token_mix + channel_mix + residuals,
# all on a single VMEM-resident (M, D) token matrix, single grid step.
# Only 4 inputs: patches + 2 weight slabs + 1 vector slab (review item #1).
# ---------------------------------------------------------------------------
def fused_mixer_kernel(p_ref, w32_ref, w64_ref, vec_ref, o_ref):
  # static, sublane-aligned slices of the packed weight slabs
  w_conv = w32_ref[0:CPP, :]                 # (CPP, D)   conv weight^T
  tm_w2 = w32_ref[CPP:CPP + DH, :]           # (DH, D)
  cm_w2 = w32_ref[CPP + DH:CPP + 2 * DH, :]  # (DH, D)
  tm_w1 = w64_ref[0:D, :]                    # (D, DH)
  cm_w1 = w64_ref[D:2 * D, :]                # (D, DH)

  # LN gamma/beta + biases, one row per vector (padded to DH lanes)
  vec = vec_ref[...]
  b_conv = vec[0:1, 0:D]
  tm_g, tm_b = vec[1:2, 0:D], vec[2:3, 0:D]
  tm_b1, tm_b2 = vec[3:4, 0:DH], vec[4:5, 0:D]
  cm_g, cm_b = vec[5:6, 0:D], vec[6:7, 0:D]
  cm_b1, cm_b2 = vec[7:8, 0:DH], vec[8:9, 0:D]

  # patch embedding: patches @ W_conv^T + b   (f32 MXU; see bf16 TODO above)
  t = jnp.dot(p_ref[...], w_conv, preferred_element_type=jnp.float32) + b_conv
  # token_mix (acts over the hidden dim, exactly as the PyTorch module does)
  t = t + _mixer_mlp(t, tm_g, tm_b, tm_w1, tm_b1, tm_w2, tm_b2)
  # channel_mix (same structure, same axis)
  t = t + _mixer_mlp(t, cm_g, cm_b, cm_w1, cm_b1, cm_w2, cm_b2)
  o_ref[...] = t.astype(o_ref.dtype)


_VMEM_SPEC = pl.BlockSpec(memory_space=pltpu.MemorySpace.VMEM)


def fused_mixer(patches, w32, w64, vec):
  m = patches.shape[0]
  return pl.pallas_call(
      fused_mixer_kernel,
      out_shape=jax.ShapeDtypeStruct((m, D), patches.dtype),
      in_specs=[_VMEM_SPEC] * 4,   # whole arrays resident in VMEM, grid=()
      out_specs=_VMEM_SPEC,
  )(patches, w32, w64, vec)


# ---------------------------------------------------------------------------
# One-time parameter packing (hoisted out of the per-forward path, review #2)
# ---------------------------------------------------------------------------
def pack_params(params):
  f32 = jnp.float32

  def row(v, width=DH):
    v = jnp.asarray(v, f32).reshape(1, -1)
    return jnp.pad(v, ((0, 0), (0, width - v.shape[1])))

  w_conv = params["conv_w"].reshape(D, CPP).T.astype(f32)        # (CPP, D)
  w32 = jnp.concatenate(
      [w_conv, params["tm_w2"], params["cm_w2"]], axis=0)        # (CPP+2DH, D)
  w64 = jnp.concatenate(
      [params["tm_w1"], params["cm_w1"]], axis=0)                # (2D, DH)
  vec = jnp.concatenate(
      [row(params["conv_b"]),
       row(params["tm_g"]), row(params["tm_b"]),
       row(params["tm_b1"]), row(params["tm_b2"]),
       row(params["cm_g"]), row(params["cm_b"]),
       row(params["cm_b1"]), row(params["cm_b2"])], axis=0)      # (9, DH)
  return {"w32": w32, "w64": w64, "vec": vec}


# ---------------------------------------------------------------------------
# Full forward: one Pallas kernel; patch extraction / final reinterpret are
# thin XLA glue on an 8 KB input (see allow_input_fusion TODO above).
# ---------------------------------------------------------------------------
@jax.jit
def mixer_forward(x, packed):
  b, c, h, w = x.shape
  hp, wp = h // P, w // P
  n = hp * wp
  # non-overlapping PxP patches in (C, P, P) order -> (B*N, C*P*P)
  patches = (x.reshape(b, c, hp, P, wp, P)
               .transpose(0, 2, 4, 1, 3, 5)
               .reshape(b * n, c * P * P))
  tokens = fused_mixer(patches, packed["w32"], packed["w64"], packed["vec"])
  # PyTorch's trailing transpose(1,2).transpose(1,2) cancels; reshape copies
  # in logical (B, N, D) row-major order -> pure row-major reinterpret here.
  return tokens.reshape(b, D, hp, wp)


# ---------------------------------------------------------------------------
# Pure-JAX reference (lax.conv + jax.scipy erf) for the correctness check
# ---------------------------------------------------------------------------
def ref_forward(x, params):
  z = jax.lax.conv_general_dilated(
      x, params["conv_w"], (P, P), "VALID",
      dimension_numbers=("NCHW", "OIHW", "NCHW"))
  z = z + params["conv_b"][None, :, None, None]
  b = x.shape[0]
  t = z.reshape(b, D, N).transpose(0, 2, 1)                   # (B, N, D)

  def mlp(t, g, be, w1, b1, w2, b2):
    mu = t.mean(-1, keepdims=True)
    var = ((t - mu) ** 2).mean(-1, keepdims=True)
    tn = (t - mu) / jnp.sqrt(var + 1e-5) * g + be
    hdd = tn @ w1 + b1
    hdd = 0.5 * hdd * (1.0 + jax.scipy.special.erf(hdd * _INV_SQRT2))
    return hdd @ w2 + b2

  t = t + mlp(t, params["tm_g"], params["tm_b"], params["tm_w1"],
              params["tm_b1"], params["tm_w2"], params["tm_b2"])
  t = t + mlp(t, params["cm_g"], params["cm_b"], params["cm_w1"],
              params["cm_b1"], params["cm_w2"], params["cm_b2"])
  return t.reshape(b, D, HP, WP)


def init_params(key):
  ks = jax.random.split(key, 16)
  s = 0.05
  f32 = jnp.float32
  return {
      "conv_w": jax.random.normal(ks[0], (D, C, P, P), f32) * s,
      "conv_b": jax.random.normal(ks[1], (D,), f32) * s,
      # token_mix: LN gamma/beta + Linear(D,2D) + Linear(2D,D) (stored (in,out))
      "tm_g": 1.0 + 0.1 * jax.random.normal(ks[2], (1, D), f32),
      "tm_b": 0.1 * jax.random.normal(ks[3], (1, D), f32),
      "tm_w1": jax.random.normal(ks[4], (D, DH), f32) * s,
      "tm_b1": jax.random.normal(ks[5], (1, DH), f32) * s,
      "tm_w2": jax.random.normal(ks[6], (DH, D), f32) * s,
      "tm_b2": jax.random.normal(ks[7], (1, D), f32) * s,
      # channel_mix
      "cm_g": 1.0 + 0.1 * jax.random.normal(ks[8], (1, D), f32),
      "cm_b": 0.1 * jax.random.normal(ks[9], (1, D), f32),
      "cm_w1": jax.random.normal(ks[10], (D, DH), f32) * s,
      "cm_b1": jax.random.normal(ks[11], (1, DH), f32) * s,
      "cm_w2": jax.random.normal(ks[12], (DH, D), f32) * s,
      "cm_b2": jax.random.normal(ks[13], (1, D), f32) * s,
  }


if __name__ == "__main__":
  key = jax.random.PRNGKey(0)
  k_x, k_p = jax.random.split(key)
  x = jax.random.normal(k_x, (B, C, H, W), jnp.float32)
  params = init_params(k_p)
  packed = pack_params(params)        # once, outside the per-forward path

  out = mixer_forward(x, packed)
  out = jax.block_until_ready(out)
  assert out.shape == (B, D, HP, WP), out.shape

  ref = ref_forward(x, params)
  max_err = float(jnp.max(jnp.abs(out - ref)))
  assert jnp.allclose(out, ref, rtol=1e-3, atol=1e-3), max_err

  print("KERNEL_OK")
</pallas_src>

<mosaic_0001>
module attributes {stable_mosaic.version = 11 : i64} {
  func.func @fused_mixer_kernel(%arg0: memref<32x64xf32, #tpu.memory_space<vmem>>, %arg1: memref<192x32xf32, #tpu.memory_space<vmem>>, %arg2: memref<64x64xf32, #tpu.memory_space<vmem>>, %arg3: memref<9x64xf32, #tpu.memory_space<vmem>>, %arg4: memref<32x32xf32, #tpu.memory_space<vmem>>) attributes {dimension_semantics = [], scalar_prefetch = 0 : i64, scratch_operands = 0 : i64, tpu.core_type = #tpu.core_type<tc>} {
    %c0 = arith.constant 0 : index
    %c0_0 = arith.constant 0 : index
    %0 = vector.load %arg1[%c0, %c0_0] : memref<192x32xf32, #tpu.memory_space<vmem>>, vector<64x32xf32>
    %c64 = arith.constant 64 : index
    %c0_1 = arith.constant 0 : index
    %1 = vector.load %arg1[%c64, %c0_1] : memref<192x32xf32, #tpu.memory_space<vmem>>, vector<64x32xf32>
    %c128 = arith.constant 128 : index
    %c0_2 = arith.constant 0 : index
    %2 = vector.load %arg1[%c128, %c0_2] : memref<192x32xf32, #tpu.memory_space<vmem>>, vector<64x32xf32>
    %c0_3 = arith.constant 0 : index
    %c0_4 = arith.constant 0 : index
    %3 = vector.load %arg2[%c0_3, %c0_4] : memref<64x64xf32, #tpu.memory_space<vmem>>, vector<32x64xf32>
    %c32 = arith.constant 32 : index
    %c0_5 = arith.constant 0 : index
    %4 = vector.load %arg2[%c32, %c0_5] : memref<64x64xf32, #tpu.memory_space<vmem>>, vector<32x64xf32>
    %c0_6 = arith.constant 0 : index
    %c0_7 = arith.constant 0 : index
    %5 = vector.load %arg3[%c0_6, %c0_7] : memref<9x64xf32, #tpu.memory_space<vmem>>, vector<9x64xf32>
    %6 = vector.extract_strided_slice %5 {offsets = [0, 0], sizes = [1, 32], strides = [1, 1]} : vector<9x64xf32> to vector<1x32xf32>
    %7 = vector.extract_strided_slice %5 {offsets = [1, 0], sizes = [1, 32], strides = [1, 1]} : vector<9x64xf32> to vector<1x32xf32>
    %8 = vector.extract_strided_slice %5 {offsets = [2, 0], sizes = [1, 32], strides = [1, 1]} : vector<9x64xf32> to vector<1x32xf32>
    %9 = vector.extract_strided_slice %5 {offsets = [3, 0], sizes = [1, 64], strides = [1, 1]} : vector<9x64xf32> to vector<1x64xf32>
    %10 = vector.extract_strided_slice %5 {offsets = [4, 0], sizes = [1, 32], strides = [1, 1]} : vector<9x64xf32> to vector<1x32xf32>
    %11 = vector.extract_strided_slice %5 {offsets = [5, 0], sizes = [1, 32], strides = [1, 1]} : vector<9x64xf32> to vector<1x32xf32>
    %12 = vector.extract_strided_slice %5 {offsets = [6, 0], sizes = [1, 32], strides = [1, 1]} : vector<9x64xf32> to vector<1x32xf32>
    %13 = vector.extract_strided_slice %5 {offsets = [7, 0], sizes = [1, 64], strides = [1, 1]} : vector<9x64xf32> to vector<1x64xf32>
    %14 = vector.extract_strided_slice %5 {offsets = [8, 0], sizes = [1, 32], strides = [1, 1]} : vector<9x64xf32> to vector<1x32xf32>
    %c0_8 = arith.constant 0 : index
    %c0_9 = arith.constant 0 : index
    %15 = vector.load %arg0[%c0_8, %c0_9] : memref<32x64xf32, #tpu.memory_space<vmem>>, vector<32x64xf32>
    %cst = arith.constant dense<0.000000e+00> : vector<32x32xf32>
    %16 = tpu.matmul %15, %0, %cst {dimension_numbers = #tpu.dot_dimension_numbers<[1], [0], [0], [1], [0, 0, 1, 1], [], []>} : vector<32x64xf32>, vector<64x32xf32>, vector<32x32xf32> -> vector<32x32xf32>
    %17 = vector.broadcast %6 : vector<1x32xf32> to vector<32x32xf32>
    %18 = arith.addf %16, %17 : vector<32x32xf32>
    %cst_10 = arith.constant dense<0.000000e+00> : vector<32xf32>
    %19 = vector.multi_reduction <add>, %18, %cst_10 [1] : vector<32x32xf32> to vector<32xf32>
    %20 = vector.shape_cast %19 : vector<32xf32> to vector<32x1xf32>
    %cst_11 = arith.constant 3.200000e+01 : f32
    %21 = vector.broadcast %cst_11 : f32 to vector<32x1xf32>
    %22 = arith.divf %20, %21 : vector<32x1xf32>
    %23 = vector.broadcast %22 : vector<32x1xf32> to vector<32x32xf32>
    %24 = arith.subf %18, %23 : vector<32x32xf32>
    %25 = vector.broadcast %22 : vector<32x1xf32> to vector<32x32xf32>
    %26 = arith.subf %18, %25 : vector<32x32xf32>
    %27 = arith.mulf %24, %26 : vector<32x32xf32>
    %cst_12 = arith.constant dense<0.000000e+00> : vector<32xf32>
    %28 = vector.multi_reduction <add>, %27, %cst_12 [1] : vector<32x32xf32> to vector<32xf32>
    %29 = vector.shape_cast %28 : vector<32xf32> to vector<32x1xf32>
    %cst_13 = arith.constant 3.200000e+01 : f32
    %30 = vector.broadcast %cst_13 : f32 to vector<32x1xf32>
    %31 = arith.divf %29, %30 : vector<32x1xf32>
    %32 = vector.broadcast %22 : vector<32x1xf32> to vector<32x32xf32>
    %33 = arith.subf %18, %32 : vector<32x32xf32>
    %cst_14 = arith.constant 9.99999974E-6 : f32
    %34 = vector.broadcast %cst_14 : f32 to vector<32x1xf32>
    %35 = arith.addf %31, %34 : vector<32x1xf32>
    %36 = math.rsqrt %35 : vector<32x1xf32>
    %37 = vector.broadcast %36 : vector<32x1xf32> to vector<32x32xf32>
    %38 = arith.mulf %33, %37 : vector<32x32xf32>
    %39 = vector.broadcast %7 : vector<1x32xf32> to vector<32x32xf32>
    %40 = arith.mulf %38, %39 : vector<32x32xf32>
    %41 = vector.broadcast %8 : vector<1x32xf32> to vector<32x32xf32>
    %42 = arith.addf %40, %41 : vector<32x32xf32>
    %cst_15 = arith.constant dense<0.000000e+00> : vector<32x64xf32>
    %43 = tpu.matmul %42, %3, %cst_15 {dimension_numbers = #tpu.dot_dimension_numbers<[1], [0], [0], [1], [0, 0, 1, 1], [], []>} : vector<32x32xf32>, vector<32x64xf32>, vector<32x64xf32> -> vector<32x64xf32>
    %44 = vector.broadcast %9 : vector<1x64xf32> to vector<32x64xf32>
    %45 = arith.addf %43, %44 : vector<32x64xf32>
    %cst_16 = arith.constant 5.000000e-01 : f32
    %46 = vector.broadcast %cst_16 : f32 to vector<32x64xf32>
    %47 = arith.mulf %46, %45 : vector<32x64xf32>
    %cst_17 = arith.constant 0.707106769 : f32
    %48 = vector.broadcast %cst_17 : f32 to vector<32x64xf32>
    %49 = arith.mulf %45, %48 : vector<32x64xf32>
    %cst_18 = arith.constant 0.000000e+00 : f32
    %50 = vector.broadcast %cst_18 : f32 to vector<32x64xf32>
    %51 = arith.cmpf oge, %49, %50 : vector<32x64xf32>
    %cst_19 = arith.constant 1.000000e+00 : f32
    %cst_20 = arith.constant -1.000000e+00 : f32
    %52 = vector.broadcast %cst_19 : f32 to vector<32x64xf32>
    %53 = vector.broadcast %cst_20 : f32 to vector<32x64xf32>
    %54 = arith.select %51, %52, %53 : vector<32x64xi1>, vector<32x64xf32>
    %55 = math.absf %49 : vector<32x64xf32>
    %cst_21 = arith.constant 0.327591091 : f32
    %56 = vector.broadcast %cst_21 : f32 to vector<32x64xf32>
    %57 = arith.mulf %56, %55 : vector<32x64xf32>
    %cst_22 = arith.constant 1.000000e+00 : f32
    %58 = vector.broadcast %cst_22 : f32 to vector<32x64xf32>
    %59 = arith.addf %58, %57 : vector<32x64xf32>
    %cst_23 = arith.constant 1.000000e+00 : f32
    %60 = vector.broadcast %cst_23 : f32 to vector<32x64xf32>
    %61 = arith.divf %60, %59 : vector<32x64xf32>
    %cst_24 = arith.constant 1.06140542 : f32
    %62 = vector.broadcast %cst_24 : f32 to vector<32x64xf32>
    %63 = arith.mulf %62, %61 : vector<32x64xf32>
    %cst_25 = arith.constant -1.45315206 : f32
    %64 = vector.broadcast %cst_25 : f32 to vector<32x64xf32>
    %65 = arith.addf %63, %64 : vector<32x64xf32>
    %66 = arith.mulf %65, %61 : vector<32x64xf32>
    %cst_26 = arith.constant 1.42141378 : f32
    %67 = vector.broadcast %cst_26 : f32 to vector<32x64xf32>
    %68 = arith.addf %66, %67 : vector<32x64xf32>
    %69 = arith.mulf %68, %61 : vector<32x64xf32>
    %cst_27 = arith.constant -0.284496725 : f32
    %70 = vector.broadcast %cst_27 : f32 to vector<32x64xf32>
    %71 = arith.addf %69, %70 : vector<32x64xf32>
    %72 = arith.mulf %71, %61 : vector<32x64xf32>
    %cst_28 = arith.constant 0.254829586 : f32
    %73 = vector.broadcast %cst_28 : f32 to vector<32x64xf32>
    %74 = arith.addf %72, %73 : vector<32x64xf32>
    %75 = arith.mulf %74, %61 : vector<32x64xf32>
    %cst_29 = arith.constant 0.000000e+00 : f32
    %76 = vector.broadcast %cst_29 : f32 to vector<32x64xf32>
    %77 = arith.subf %76, %55 : vector<32x64xf32>
    %78 = arith.mulf %77, %55 : vector<32x64xf32>
    %79 = math.exp %78 : vector<32x64xf32>
    %80 = arith.mulf %75, %79 : vector<32x64xf32>
    %cst_30 = arith.constant 1.000000e+00 : f32
    %81 = vector.broadcast %cst_30 : f32 to vector<32x64xf32>
    %82 = arith.subf %81, %80 : vector<32x64xf32>
    %83 = arith.mulf %54, %82 : vector<32x64xf32>
    %cst_31 = arith.constant 1.000000e+00 : f32
    %84 = vector.broadcast %cst_31 : f32 to vector<32x64xf32>
    %85 = arith.addf %84, %83 : vector<32x64xf32>
    %86 = arith.mulf %47, %85 : vector<32x64xf32>
    %cst_32 = arith.constant dense<0.000000e+00> : vector<32x32xf32>
    %87 = tpu.matmul %86, %1, %cst_32 {dimension_numbers = #tpu.dot_dimension_numbers<[1], [0], [0], [1], [0, 0, 1, 1], [], []>} : vector<32x64xf32>, vector<64x32xf32>, vector<32x32xf32> -> vector<32x32xf32>
    %88 = vector.broadcast %10 : vector<1x32xf32> to vector<32x32xf32>
    %89 = arith.addf %87, %88 : vector<32x32xf32>
    %90 = arith.addf %18, %89 : vector<32x32xf32>
    %cst_33 = arith.constant dense<0.000000e+00> : vector<32xf32>
    %91 = vector.multi_reduction <add>, %90, %cst_33 [1] : vector<32x32xf32> to vector<32xf32>
    %92 = vector.shape_cast %91 : vector<32xf32> to vector<32x1xf32>
    %cst_34 = arith.constant 3.200000e+01 : f32
    %93 = vector.broadcast %cst_34 : f32 to vector<32x1xf32>
    %94 = arith.divf %92, %93 : vector<32x1xf32>
    %95 = vector.broadcast %94 : vector<32x1xf32> to vector<32x32xf32>
    %96 = arith.subf %90, %95 : vector<32x32xf32>
    %97 = vector.broadcast %94 : vector<32x1xf32> to vector<32x32xf32>
    %98 = arith.subf %90, %97 : vector<32x32xf32>
    %99 = arith.mulf %96, %98 : vector<32x32xf32>
    %cst_35 = arith.constant dense<0.000000e+00> : vector<32xf32>
    %100 = vector.multi_reduction <add>, %99, %cst_35 [1] : vector<32x32xf32> to vector<32xf32>
    %101 = vector.shape_cast %100 : vector<32xf32> to vector<32x1xf32>
    %cst_36 = arith.constant 3.200000e+01 : f32
    %102 = vector.broadcast %cst_36 : f32 to vector<32x1xf32>
    %103 = arith.divf %101, %102 : vector<32x1xf32>
    %104 = vector.broadcast %94 : vector<32x1xf32> to vector<32x32xf32>
    %105 = arith.subf %90, %104 : vector<32x32xf32>
    %cst_37 = arith.constant 9.99999974E-6 : f32
    %106 = vector.broadcast %cst_37 : f32 to vector<32x1xf32>
    %107 = arith.addf %103, %106 : vector<32x1xf32>
    %108 = math.rsqrt %107 : vector<32x1xf32>
    %109 = vector.broadcast %108 : vector<32x1xf32> to vector<32x32xf32>
    %110 = arith.mulf %105, %109 : vector<32x32xf32>
    %111 = vector.broadcast %11 : vector<1x32xf32> to vector<32x32xf32>
    %112 = arith.mulf %110, %111 : vector<32x32xf32>
    %113 = vector.broadcast %12 : vector<1x32xf32> to vector<32x32xf32>
    %114 = arith.addf %112, %113 : vector<32x32xf32>
    %cst_38 = arith.constant dense<0.000000e+00> : vector<32x64xf32>
    %115 = tpu.matmul %114, %4, %cst_38 {dimension_numbers = #tpu.dot_dimension_numbers<[1], [0], [0], [1], [0, 0, 1, 1], [], []>} : vector<32x32xf32>, vector<32x64xf32>, vector<32x64xf32> -> vector<32x64xf32>
    %116 = vector.broadcast %13 : vector<1x64xf32> to vector<32x64xf32>
    %117 = arith.addf %115, %116 : vector<32x64xf32>
    %cst_39 = arith.constant 5.000000e-01 : f32
    %118 = vector.broadcast %cst_39 : f32 to vector<32x64xf32>
    %119 = arith.mulf %118, %117 : vector<32x64xf32>
    %cst_40 = arith.constant 0.707106769 : f32
    %120 = vector.broadcast %cst_40 : f32 to vector<32x64xf32>
    %121 = arith.mulf %117, %120 : vector<32x64xf32>
    %cst_41 = arith.constant 0.000000e+00 : f32
    %122 = vector.broadcast %cst_41 : f32 to vector<32x64xf32>
    %123 = arith.cmpf oge, %121, %122 : vector<32x64xf32>
    %cst_42 = arith.constant 1.000000e+00 : f32
    %cst_43 = arith.constant -1.000000e+00 : f32
    %124 = vector.broadcast %cst_42 : f32 to vector<32x64xf32>
    %125 = vector.broadcast %cst_43 : f32 to vector<32x64xf32>
    %126 = arith.select %123, %124, %125 : vector<32x64xi1>, vector<32x64xf32>
    %127 = math.absf %121 : vector<32x64xf32>
    %cst_44 = arith.constant 0.327591091 : f32
    %128 = vector.broadcast %cst_44 : f32 to vector<32x64xf32>
    %129 = arith.mulf %128, %127 : vector<32x64xf32>
    %cst_45 = arith.constant 1.000000e+00 : f32
    %130 = vector.broadcast %cst_45 : f32 to vector<32x64xf32>
    %131 = arith.addf %130, %129 : vector<32x64xf32>
    %cst_46 = arith.constant 1.000000e+00 : f32
    %132 = vector.broadcast %cst_46 : f32 to vector<32x64xf32>
    %133 = arith.divf %132, %131 : vector<32x64xf32>
    %cst_47 = arith.constant 1.06140542 : f32
    %134 = vector.broadcast %cst_47 : f32 to vector<32x64xf32>
    %135 = arith.mulf %134, %133 : vector<32x64xf32>
    %cst_48 = arith.constant -1.45315206 : f32
    %136 = vector.broadcast %cst_48 : f32 to vector<32x64xf32>
    %137 = arith.addf %135, %136 : vector<32x64xf32>
    %138 = arith.mulf %137, %133 : vector<32x64xf32>
    %cst_49 = arith.constant 1.42141378 : f32
    %139 = vector.broadcast %cst_49 : f32 to vector<32x64xf32>
    %140 = arith.addf %138, %139 : vector<32x64xf32>
    %141 = arith.mulf %140, %133 : vector<32x64xf32>
    %cst_50 = arith.constant -0.284496725 : f32
    %142 = vector.broadcast %cst_50 : f32 to vector<32x64xf32>
    %143 = arith.addf %141, %142 : vector<32x64xf32>
    %144 = arith.mulf %143, %133 : vector<32x64xf32>
    %cst_51 = arith.constant 0.254829586 : f32
    %145 = vector.broadcast %cst_51 : f32 to vector<32x64xf32>
    %146 = arith.addf %144, %145 : vector<32x64xf32>
    %147 = arith.mulf %146, %133 : vector<32x64xf32>
    %cst_52 = arith.constant 0.000000e+00 : f32
    %148 = vector.broadcast %cst_52 : f32 to vector<32x64xf32>
    %149 = arith.subf %148, %127 : vector<32x64xf32>
    %150 = arith.mulf %149, %127 : vector<32x64xf32>
    %151 = math.exp %150 : vector<32x64xf32>
    %152 = arith.mulf %147, %151 : vector<32x64xf32>
    %cst_53 = arith.constant 1.000000e+00 : f32
    %153 = vector.broadcast %cst_53 : f32 to vector<32x64xf32>
    %154 = arith.subf %153, %152 : vector<32x64xf32>
    %155 = arith.mulf %126, %154 : vector<32x64xf32>
    %cst_54 = arith.constant 1.000000e+00 : f32
    %156 = vector.broadcast %cst_54 : f32 to vector<32x64xf32>
    %157 = arith.addf %156, %155 : vector<32x64xf32>
    %158 = arith.mulf %119, %157 : vector<32x64xf32>
    %cst_55 = arith.constant dense<0.000000e+00> : vector<32x32xf32>
    %159 = tpu.matmul %158, %2, %cst_55 {dimension_numbers = #tpu.dot_dimension_numbers<[1], [0], [0], [1], [0, 0, 1, 1], [], []>} : vector<32x64xf32>, vector<64x32xf32>, vector<32x32xf32> -> vector<32x32xf32>
    %160 = vector.broadcast %14 : vector<1x32xf32> to vector<32x32xf32>
    %161 = arith.addf %159, %160 : vector<32x32xf32>
    %162 = arith.addf %90, %161 : vector<32x32xf32>
    %c0_56 = arith.constant 0 : index
    %c0_57 = arith.constant 0 : index
    %163 = vector.load %arg4[%c0_56, %c0_57] : memref<32x32xf32, #tpu.memory_space<vmem>>, vector<32x32xf32>
    tpu.vector_store %arg4[%c0_56, %c0_57], %162 {strides = array<i32>} : memref<32x32xf32, #tpu.memory_space<vmem>>, vector<32x32xf32>,
    return
  }
}

</mosaic_0001>

<llo_original>
// kernel: mixer_forward.1
$region0: #{mixer_forward.1}
  #allocation0 [shape = 'u32[]', space=smem, size = 0x4, offset = 0x4, fixed_abs, tag = 'smem constant byte address 0x4 - core index']
  #allocation1 [shape = 'u32[144,128]{1,0:T(1,128)}', space=vmem, size = 0x12000, scoped, tag = 'internal scratch']
  %s0 = inlined_call_operand.vmem [shape: f32[32,64], index: 0, kind: input, shape index: {}]
  %s1 = inlined_call_operand.vmem [shape: f32[192,32], index: 1, kind: input, shape index: {}]
  %s2 = inlined_call_operand.vmem [shape: f32[64,64], index: 2, kind: input, shape index: {}]
  %s3 = inlined_call_operand.vmem [shape: f32[9,64], index: 3, kind: input, shape index: {}]
  %s4 = inlined_call_operand.vmem [shape: f32[32,32], index: 4, kind: output, shape index: {}]
  %s5 = sld [smem:[#allocation0]]
  $region26: #{mixer_forward.1} parent=0
    _
  %s7 = ssub.s32 1, %s5
  %s8 = scalar_select 0, %s7, %s5
  // Predicated region
  $region2: #{mixer_forward.1} parent=0 // pred_check
    _
  $region3: #{mixer_forward.1} parent=0 // pred_check_branch
    %10 = sbr.rel (0) target = $region5
  $region4: #{mixer_forward.1} parent=0 // pred_region
    _
  $region5: #{mixer_forward.1} parent=0 // pred_fallthru
    _
  // Predicated region
  $region6: #{mixer_forward.1} parent=0 // pred_check
    _
  $region7: #{mixer_forward.1} parent=0 // pred_check_branch
    %12 = sbr.rel (0) target = $region9
  $region8: #{mixer_forward.1} parent=0 // pred_region
    _
  $region9: #{mixer_forward.1} parent=0 // pred_fallthru
    _
  // Predicated region
  $region10: #{mixer_forward.1} parent=0 // pred_check
    _
  $region11: #{mixer_forward.1} parent=0 // pred_check_branch
    %14 = sbr.rel (0) target = $region13
  $region12: #{mixer_forward.1} parent=0 // pred_region
    _
  $region13: #{mixer_forward.1} parent=0 // pred_fallthru
    _
  // Predicated region
  $region14: #{mixer_forward.1} parent=0 // pred_check
    _
  $region15: #{mixer_forward.1} parent=0 // pred_check_branch
    %16 = sbr.rel (0) target = $region17
  $region16: #{mixer_forward.1} parent=0 // pred_region
    _
  $region17: #{mixer_forward.1} parent=0 // pred_fallthru
    _
  %v17 = vld [vmem:[%s1] sm:$0xff]
  %v18 = vld [vmem:[%s1 + $0x8] sm:$0xff]
  %v19 = vld [vmem:[%s1 + $0x10] sm:$0xff]
  %v20 = vld [vmem:[%s1 + $0x18] sm:$0xff]
  %v21 = vld [vmem:[%s1 + $0x20] sm:$0xff]
  %v22 = vld [vmem:[%s1 + $0x28] sm:$0xff]
  %v23 = vld [vmem:[%s1 + $0x30] sm:$0xff]
  %v24 = vld [vmem:[%s1 + $0x38] sm:$0xff]
  %v25 = vld [vmem:[%s1 + $0x40] sm:$0xff]
  %v26 = vld [vmem:[%s1 + $0x48] sm:$0xff]
  %v27 = vld [vmem:[%s1 + $0x50] sm:$0xff]
  %v28 = vld [vmem:[%s1 + $0x58] sm:$0xff]
  %v29 = vld [vmem:[%s1 + $0x60] sm:$0xff]
  %v30 = vld [vmem:[%s1 + $0x68] sm:$0xff]
  %v31 = vld [vmem:[%s1 + $0x70] sm:$0xff]
  %v32 = vld [vmem:[%s1 + $0x78] sm:$0xff]
  %v33 = vld [vmem:[%s1 + $0x80] sm:$0xff]
  %v34 = vld [vmem:[%s1 + $0x88] sm:$0xff]
  %v35 = vld [vmem:[%s1 + $0x90] sm:$0xff]
  %v36 = vld [vmem:[%s1 + $0x98] sm:$0xff]
  %v37 = vld [vmem:[%s1 + $0xa0] sm:$0xff]
  %v38 = vld [vmem:[%s1 + $0xa8] sm:$0xff]
  %v39 = vld [vmem:[%s1 + $0xb0] sm:$0xff]
  %v40 = vld [vmem:[%s1 + $0xb8] sm:$0xff]
  %v41 = vld [vmem:[%s2] sm:$0xff]
  %v42 = vld [vmem:[%s2 + $0x8] sm:$0xff]
  %v43 = vld [vmem:[%s2 + $0x10] sm:$0xff]
  %v44 = vld [vmem:[%s2 + $0x18] sm:$0xff]
  %v45 = vld [vmem:[%s2 + $0x20] sm:$0xff]
  %v46 = vld [vmem:[%s2 + $0x28] sm:$0xff]
  %v47 = vld [vmem:[%s2 + $0x30] sm:$0xff]
  %v48 = vld [vmem:[%s2 + $0x38] sm:$0xff]
  %v49 = vld [vmem:[%s3] sm:$0xff]
  %v50 = vld [vmem:[%s3 + $0x8] sm:$0x1]
  %v51 = vld [vmem:[%s0] sm:$0xff]
  %v52 = vld [vmem:[%s0 + $0x8] sm:$0xff]
  %v53 = vld [vmem:[%s0 + $0x10] sm:$0xff]
  %v54 = vld [vmem:[%s0 + $0x18] sm:$0xff]
  %v55 = vlaneseq
  %v56 = vshrl.u32 %v55, 7
  %v57 = vsub.s32 0, %v56
  %v58 = vrot.slane %v49, %v57
  %vm59 = vcmask 523264
  %v61 = vsel %vm59, %v51, 0
  %v64 = vsel %vm59, %v52, 0
  %v67 = vsel %vm59, %v53, 0
  %v70 = vsel %vm59, %v54, 0
  %72 = vmatprep.subr.mxu0 0.0
  %73 = vmatpush1.msra.mxu0 %v17
  %74 = vmatprep.subr.mxu0 0.0
  %75 = vmatpush1.msra.mxu0 %v18
  %76 = vmatprep.subr.mxu0 0.0
  %77 = vmatpush1.msra.mxu0 %v19
  %78 = vmatprep.subr.mxu0 0.0
  %79 = vmatpush1.msra.mxu0 %v20
  %80 = vmatprep.subr.mxu0 0.0
  %81 = vmatpush1.msra.mxu0 %v21
  %82 = vmatprep.subr.mxu0 0.0
  %83 = vmatpush1.msra.mxu0 %v22
  %84 = vmatprep.subr.mxu0 0.0
  %85 = vmatpush1.msra.mxu0 %v23
  %86 = vmatprep.subr.mxu0 0.0
  %87 = vmatpush1.msra.mxu0 %v24
  %88 = vmatprep.subr.mxu0 0.0
  %89 = vmatpush1.msra.mxu0 0.0
  %90 = vmatprep.subr.mxu0 0.0
  %91 = vmatpush1.msra.mxu0 0.0
  %92 = vmatprep.subr.mxu0 0.0
  %93 = vmatpush1.msra.mxu0 0.0
  %94 = vmatprep.subr.mxu0 0.0
  %95 = vmatpush1.msra.mxu0 0.0
  %96 = vmatprep.subr.mxu0 0.0
  %97 = vmatpush1.msra.mxu0 0.0
  %98 = vmatprep.subr.mxu0 0.0
  %99 = vmatpush1.msra.mxu0 0.0
  %100 = vmatprep.subr.mxu0 0.0
  %101 = vmatpush1.msra.mxu0 0.0
  %102 = vmatprep.subr.mxu0 0.0
  %103 = vmatpush1.msra.mxu0 0.0
  %104 = vmatprep.subr.mxu0 0.0
  %105 = vmatpush1.msra.mxu0 0.0
  %106 = vmatprep.subr.mxu0 0.0
  %107 = vmatpush1.msra.mxu0 0.0
  %108 = vmatprep.subr.mxu0 0.0
  %109 = vmatpush1.msra.mxu0 0.0
  %110 = vmatprep.subr.mxu0 0.0
  %111 = vmatpush1.msra.mxu0 0.0
  %112 = vmatprep.subr.mxu0 0.0
  %113 = vmatpush1.msra.mxu0 0.0
  %114 = vmatprep.subr.mxu0 0.0
  %115 = vmatpush1.msra.mxu0 0.0
  %116 = vmatprep.subr.mxu0 0.0
  %117 = vmatpush1.msra.mxu0 0.0
  %118 = vmatprep.subr.mxu0 0.0
  %119 = vmatpush1.msra.mxu0 0.0
  %120 = vmatprep.subr.mxu0 0.0
  %121 = vmatpush1.msra.mxu0 0.0
  %122 = vmatprep.subr.mxu0 0.0
  %123 = vmatpush1.msra.mxu0 0.0
  %124 = vmatprep.subr.mxu0 0.0
  %125 = vmatpush1.msra.mxu0 0.0
  %126 = vmatprep.subr.mxu0 0.0
  %127 = vmatpush1.msra.mxu0 0.0
  %128 = vmatprep.subr.mxu0 0.0
  %129 = vmatpush1.msra.mxu0 0.0
  %130 = vmatprep.subr.mxu0 0.0
  %131 = vmatpush1.msra.mxu0 0.0
  %132 = vmatprep.subr.mxu0 0.0
  %133 = vmatpush1.msra.mxu0 0.0
  %134 = vmatprep.subr.mxu0 0.0
  %135 = vmatpush1.msra.mxu0 0.0
  %136 = vmatprep.mubr.f32.mxu0 0.0
  %137 = vmatmul.mubr.f32.gmra.mrb[0].mxu0 %v61
  %v138 = vpop.f32.mrb[0].mxu0
  %v139 = vadd.f32 %v58, %v138
  %v140 = vpop.f32.mrb[0].mxu0
  %141 = vmatprep.mubr.f32.mxu0 0.0
  %142 = vmatmul.mubr.f32.gmra.mrb[0].mxu0 %v64
  %v143 = vpop.f32.mrb[0].mxu0
  %v144 = vadd.f32 %v58, %v143
  %v145 = vpop.f32.mrb[0].mxu0
  %146 = vmatprep.mubr.f32.mxu0 0.0
  %147 = vmatmul.mubr.f32.gmra.mrb[0].mxu0 %v67
  %v148 = vpop.f32.mrb[0].mxu0
  %v149 = vadd.f32 %v58, %v148
  %v150 = vpop.f32.mrb[0].mxu0
  %151 = vmatprep.mubr.f32.mxu0 0.0
  %152 = vmatmul.mubr.f32.gmra.mrb[0].mxu0 %v70
  %v153 = vpop.f32.mrb[0].mxu0
  %v154 = vadd.f32 %v58, %v153
  %v155 = vpop.f32.mrb[0].mxu0
  %156 = vdwg.mxu0
  %vm157 = vcmask 261120
  %v158 = vsel %vm157, %v139, 0.0
  %159 = vadd.xlane.f32.xlu0 %v158
  %v160 = vpop.xlane.xlu0 %159
  %v161 = vsel %vm157, %v144, 0.0
  %162 = vadd.xlane.f32.xlu0 %v161
  %v163 = vpop.xlane.xlu0 %162
  %v164 = vsel %vm157, %v149, 0.0
  %165 = vadd.xlane.f32.xlu0 %v164
  %v166 = vpop.xlane.xlu0 %165
  %v167 = vsel %vm157, %v154, 0.0
  %168 = vadd.xlane.f32.xlu0 %v167
  %v169 = vpop.xlane.xlu0 %168
  %v170 = vrcp.pop 32.0
  %v171 = vmul.f32 %v160, %v170
  %v172 = vmul.f32 %v163, %v170
  %v173 = vmul.f32 %v166, %v170
  %v174 = vmul.f32 %v169, %v170
  %v175 = vsub.f32 %v139, %v171
  %v176 = vsub.f32 %v144, %v172
  %v177 = vsub.f32 %v149, %v173
  %v178 = vsub.f32 %v154, %v174
  %v179 = vmul.f32 %v175, %v175
  %v180 = vmul.f32 %v176, %v176
  %v181 = vmul.f32 %v177, %v177
  %v182 = vmul.f32 %v178, %v178
  %v183 = vsel %vm157, %v179, 0.0
  %184 = vadd.xlane.f32.xlu0 %v183
  %v185 = vpop.xlane.xlu0 %184
  %v186 = vsel %vm157, %v180, 0.0
  %187 = vadd.xlane.f32.xlu0 %v186
  %v188 = vpop.xlane.xlu0 %187
  %v189 = vsel %vm157, %v181, 0.0
  %190 = vadd.xlane.f32.xlu0 %v189
  %v191 = vpop.xlane.xlu0 %190
  %v192 = vsel %vm157, %v182, 0.0
  %193 = vadd.xlane.f32.xlu0 %v192
  %v194 = vpop.xlane.xlu0 %193
  %v195 = vmul.f32 %v185, %v170
  %v196 = vmul.f32 %v188, %v170
  %v197 = vmul.f32 %v191, %v170
  %v198 = vmul.f32 %v194, %v170
  %v199 = vadd.f32 %v195, 1e-05
  %v200 = vadd.f32 %v196, 1e-05
  %v201 = vadd.f32 %v197, 1e-05
  %v202 = vadd.f32 %v198, 1e-05
  %v203 = vrsqrt.pop %v199
  %v204 = vrsqrt.pop %v200
  %v205 = vrsqrt.pop %v201
  %v206 = vrsqrt.pop %v202
  %v207 = vmul.f32 %v175, %v203
  %v208 = vmul.f32 %v176, %v204
  %v209 = vmul.f32 %v177, %v205
  %v210 = vmul.f32 %v178, %v206
  %v211 = vlaneseq
  %v212 = vshrl.u32 %v211, 7
  %v213 = vsub.s32 1, %v212
  %v214 = vrot.slane %v49, %v213
  %v215 = vmul.f32 %v207, %v214
  %v216 = vmul.f32 %v208, %v214
  %v217 = vmul.f32 %v209, %v214
  %v218 = vmul.f32 %v210, %v214
  %v219 = vlaneseq
  %v220 = vshrl.u32 %v219, 7
  %v221 = vsub.s32 2, %v220
  %v222 = vrot.slane %v49, %v221
  %v223 = vadd.f32 %v215, %v222
  %v224 = vadd.f32 %v216, %v222
  %v225 = vadd.f32 %v217, %v222
  %v226 = vadd.f32 %v218, %v222
  %v227 = vlaneseq
  %v228 = vshrl.u32 %v227, 7
  %v229 = vsub.s32 3, %v228
  %v230 = vrot.slane %v49, %v229
  %v232 = vsel %vm157, %v223, 0
  %v235 = vsel %vm157, %v224, 0
  %v238 = vsel %vm157, %v225, 0
  %v241 = vsel %vm157, %v226, 0
  %243 = vmatprep.subr.mxu0 0.0
  %244 = vmatpush1.msra.mxu0 %v41
  %245 = vmatprep.subr.mxu0 0.0
  %246 = vmatpush1.msra.mxu0 %v42
  %247 = vmatprep.subr.mxu0 0.0
  %248 = vmatpush1.msra.mxu0 %v43
  %249 = vmatprep.subr.mxu0 0.0
  %250 = vmatpush1.msra.mxu0 %v44
  %251 = vmatprep.subr.mxu0 0.0
  %252 = vmatpush1.msra.mxu0 0.0
  %253 = vmatprep.subr.mxu0 0.0
  %254 = vmatpush1.msra.mxu0 0.0
  %255 = vmatprep.subr.mxu0 0.0
  %256 = vmatpush1.msra.mxu0 0.0
  %257 = vmatprep.subr.mxu0 0.0
  %258 = vmatpush1.msra.mxu0 0.0
  %259 = vmatprep.subr.mxu0 0.0
  %260 = vmatpush1.msra.mxu0 0.0
  %261 = vmatprep.subr.mxu0 0.0
  %262 = vmatpush1.msra.mxu0 0.0
  %263 = vmatprep.subr.mxu0 0.0
  %264 = vmatpush1.msra.mxu0 0.0
  %265 = vmatprep.subr.mxu0 0.0
  %266 = vmatpush1.msra.mxu0 0.0
  %267 = vmatprep.subr.mxu0 0.0
  %268 = vmatpush1.msra.mxu0 0.0
  %269 = vmatprep.subr.mxu0 0.0
  %270 = vmatpush1.msra.mxu0 0.0
  %271 = vmatprep.subr.mxu0 0.0
  %272 = vmatpush1.msra.mxu0 0.0
  %273 = vmatprep.subr.mxu0 0.0
  %274 = vmatpush1.msra.mxu0 0.0
  %275 = vmatprep.subr.mxu0 0.0
  %276 = vmatpush1.msra.mxu0 0.0
  %277 = vmatprep.subr.mxu0 0.0
  %278 = vmatpush1.msra.mxu0 0.0
  %279 = vmatprep.subr.mxu0 0.0
  %280 = vmatpush1.msra.mxu0 0.0
  %281 = vmatprep.subr.mxu0 0.0
  %282 = vmatpush1.msra.mxu0 0.0
  %283 = vmatprep.subr.mxu0 0.0
  %284 = vmatpush1.msra.mxu0 0.0
  %285 = vmatprep.subr.mxu0 0.0
  %286 = vmatpush1.msra.mxu0 0.0
  %287 = vmatprep.subr.mxu0 0.0
  %288 = vmatpush1.msra.mxu0 0.0
  %289 = vmatprep.subr.mxu0 0.0
  %290 = vmatpush1.msra.mxu0 0.0
  %291 = vmatprep.subr.mxu0 0.0
  %292 = vmatpush1.msra.mxu0 0.0
  %293 = vmatprep.subr.mxu0 0.0
  %294 = vmatpush1.msra.mxu0 0.0
  %295 = vmatprep.subr.mxu0 0.0
  %296 = vmatpush1.msra.mxu0 0.0
  %297 = vmatprep.subr.mxu0 0.0
  %298 = vmatpush1.msra.mxu0 0.0
  %299 = vmatprep.subr.mxu0 0.0
  %300 = vmatpush1.msra.mxu0 0.0
  %301 = vmatprep.subr.mxu0 0.0
  %302 = vmatpush1.msra.mxu0 0.0
  %303 = vmatprep.subr.mxu0 0.0
  %304 = vmatpush1.msra.mxu0 0.0
  %305 = vmatprep.subr.mxu0 0.0
  %306 = vmatpush1.msra.mxu0 0.0
  %307 = vmatprep.mubr.f32.mxu0 0.0
  %308 = vmatmul.mubr.f32.gmra.mrb[0].mxu0 %v232
  %v309 = vpop.f32.mrb[0].mxu0
  %v310 = vadd.f32 %v230, %v309
  %v311 = vpop.f32.mrb[0].mxu0
  %312 = vmatprep.mubr.f32.mxu0 0.0
  %313 = vmatmul.mubr.f32.gmra.mrb[0].mxu0 %v235
  %v314 = vpop.f32.mrb[0].mxu0
  %v315 = vadd.f32 %v230, %v314
  %v316 = vpop.f32.mrb[0].mxu0
  %317 = vmatprep.mubr.f32.mxu0 0.0
  %318 = vmatmul.mubr.f32.gmra.mrb[0].mxu0 %v238
  %v319 = vpop.f32.mrb[0].mxu0
  %v320 = vadd.f32 %v230, %v319
  %v321 = vpop.f32.mrb[0].mxu0
  %322 = vmatprep.mubr.f32.mxu0 0.0
  %323 = vmatmul.mubr.f32.gmra.mrb[0].mxu0 %v241
  %v324 = vpop.f32.mrb[0].mxu0
  %v325 = vadd.f32 %v230, %v324
  %v326 = vpop.f32.mrb[0].mxu0
  %327 = vdwg.mxu0
  %v328 = vmul.f32 %v310, 0.5
  %v329 = vmul.f32 %v315, 0.5
  %v330 = vmul.f32 %v320, 0.5
  %v331 = vmul.f32 %v325, 0.5
  %v332 = vmul.f32 %v310, 0.70710677
  %v333 = vmul.f32 %v315, 0.70710677
  %v334 = vmul.f32 %v320, 0.70710677
  %v335 = vmul.f32 %v325, 0.70710677
  %vm336 = vcmp.ge.f32.partialorder %v332, 0.0
  %vm337 = vcmp.ge.f32.partialorder %v333, 0.0
  %vm338 = vcmp.ge.f32.partialorder %v334, 0.0
  %vm339 = vcmp.ge.f32.partialorder %v335, 0.0
  %v340 = vsel %vm336, 1.0, -1.0
  %v341 = vsel %vm337, 1.0, -1.0
  %v342 = vsel %vm338, 1.0, -1.0
  %v343 = vsel %vm339, 1.0, -1.0
  %v344 = vand.u32 2147483647, %v332
  %v345 = vand.u32 2147483647, %v333
  %v346 = vand.u32 2147483647, %v334
  %v347 = vand.u32 2147483647, %v335
  %v348 = vmul.f32 %v344, 0.3275911
  %v349 = vmul.f32 %v345, 0.3275911
  %v350 = vmul.f32 %v346, 0.3275911
  %v351 = vmul.f32 %v347, 0.3275911
  %v352 = vadd.f32 %v348, 1.0
  %v353 = vadd.f32 %v349, 1.0
  %v354 = vadd.f32 %v350, 1.0
  %v355 = vadd.f32 %v351, 1.0
  %v356 = vrcp.pop %v352
  %v357 = vmul.f32 1.0, %v356
  %v358 = vrcp.pop %v353
  %v359 = vmul.f32 1.0, %v358
  %v360 = vrcp.pop %v354
  %v361 = vmul.f32 1.0, %v360
  %v362 = vrcp.pop %v355
  %v363 = vmul.f32 1.0, %v362
  %v364 = vmul.f32 %v357, 1.0614054
  %v365 = vmul.f32 %v359, 1.0614054
  %v366 = vmul.f32 %v361, 1.0614054
  %v367 = vmul.f32 %v363, 1.0614054
  %v368 = vadd.f32 %v364, -1.4531521
  %v369 = vadd.f32 %v365, -1.4531521
  %v370 = vadd.f32 %v366, -1.4531521
  %v371 = vadd.f32 %v367, -1.4531521
  %v372 = vmul.f32 %v368, %v357
  %v373 = vmul.f32 %v369, %v359
  %v374 = vmul.f32 %v370, %v361
  %v375 = vmul.f32 %v371, %v363
  %v376 = vadd.f32 %v372, 1.4214138
  %v377 = vadd.f32 %v373, 1.4214138
  %v378 = vadd.f32 %v374, 1.4214138
  %v379 = vadd.f32 %v375, 1.4214138
  %v380 = vmul.f32 %v376, %v357
  %v381 = vmul.f32 %v377, %v359
  %v382 = vmul.f32 %v378, %v361
  %v383 = vmul.f32 %v379, %v363
  %v384 = vadd.f32 %v380, -0.28449672
  %v385 = vadd.f32 %v381, -0.28449672
  %v386 = vadd.f32 %v382, -0.28449672
  %v387 = vadd.f32 %v383, -0.28449672
  %v388 = vmul.f32 %v384, %v357
  %v389 = vmul.f32 %v385, %v359
  %v390 = vmul.f32 %v386, %v361
  %v391 = vmul.f32 %v387, %v363
  %v392 = vadd.f32 %v388, 0.2548296
  %v393 = vadd.f32 %v389, 0.2548296
  %v394 = vadd.f32 %v390, 0.2548296
  %v395 = vadd.f32 %v391, 0.2548296
  %v396 = vmul.f32 %v392, %v357
  %v397 = vmul.f32 %v393, %v359
  %v398 = vmul.f32 %v394, %v361
  %v399 = vmul.f32 %v395, %v363
  %v400 = vsub.f32 0.0, %v344
  %v401 = vsub.f32 0.0, %v345
  %v402 = vsub.f32 0.0, %v346
  %v403 = vsub.f32 0.0, %v347
  %v404 = vmul.f32 %v400, %v344
  %v405 = vmul.f32 %v401, %v345
  %v406 = vmul.f32 %v402, %v346
  %v407 = vmul.f32 %v403, %v347
  %v408 = vmul.f32 %v404, 1.442695
  %v409 = vpow.pop %v408
  %v410 = vmul.f32 %v405, 1.442695
  %v411 = vpow.pop %v410
  %v412 = vmul.f32 %v406, 1.442695
  %v413 = vpow.pop %v412
  %v414 = vmul.f32 %v407, 1.442695
  %v415 = vpow.pop %v414
  %v416 = vmul.f32 %v396, %v409
  %v417 = vmul.f32 %v397, %v411
  %v418 = vmul.f32 %v398, %v413
  %v419 = vmul.f32 %v399, %v415
  %v420 = vsub.f32 1.0, %v416
  %v421 = vsub.f32 1.0, %v417
  %v422 = vsub.f32 1.0, %v418
  %v423 = vsub.f32 1.0, %v419
  %v424 = vmul.f32 %v340, %v420
  %v425 = vmul.f32 %v341, %v421
  %v426 = vmul.f32 %v342, %v422
  %v427 = vmul.f32 %v343, %v423
  %v428 = vadd.f32 %v424, 1.0
  %v429 = vadd.f32 %v425, 1.0
  %v430 = vadd.f32 %v426, 1.0
  %v431 = vadd.f32 %v427, 1.0
  %v432 = vmul.f32 %v328, %v428
  %v433 = vmul.f32 %v329, %v429
  %v434 = vmul.f32 %v330, %v430
  %v435 = vmul.f32 %v331, %v431
  %v436 = vlaneseq
  %v437 = vshrl.u32 %v436, 7
  %v438 = vsub.s32 4, %v437
  %v439 = vrot.slane %v49, %v438
  %v441 = vsel %vm59, %v432, 0
  %v444 = vsel %vm59, %v433, 0
  %v447 = vsel %vm59, %v434, 0
  %v450 = vsel %vm59, %v435, 0
  %452 = vmatprep.subr.mxu0 0.0
  %453 = vmatpush1.msra.mxu0 %v25
  %454 = vmatprep.subr.mxu0 0.0
  %455 = vmatpush1.msra.mxu0 %v26
  %456 = vmatprep.subr.mxu0 0.0
  %457 = vmatpush1.msra.mxu0 %v27
  %458 = vmatprep.subr.mxu0 0.0
  %459 = vmatpush1.msra.mxu0 %v28
  %460 = vmatprep.subr.mxu0 0.0
  %461 = vmatpush1.msra.mxu0 %v29
  %462 = vmatprep.subr.mxu0 0.0
  %463 = vmatpush1.msra.mxu0 %v30
  %464 = vmatprep.subr.mxu0 0.0
  %465 = vmatpush1.msra.mxu0 %v31
  %466 = vmatprep.subr.mxu0 0.0
  %467 = vmatpush1.msra.mxu0 %v32
  %468 = vmatprep.subr.mxu0 0.0
  %469 = vmatpush1.msra.mxu0 0.0
  %470 = vmatprep.subr.mxu0 0.0
  %471 = vmatpush1.msra.mxu0 0.0
  %472 = vmatprep.subr.mxu0 0.0
  %473 = vmatpush1.msra.mxu0 0.0
  %474 = vmatprep.subr.mxu0 0.0
  %475 = vmatpush1.msra.mxu0 0.0
  %476 = vmatprep.subr.mxu0 0.0
  %477 = vmatpush1.msra.mxu0 0.0
  %478 = vmatprep.subr.mxu0 0.0
  %479 = vmatpush1.msra.mxu0 0.0
  %480 = vmatprep.subr.mxu0 0.0
  %481 = vmatpush1.msra.mxu0 0.0
  %482 = vmatprep.subr.mxu0 0.0
  %483 = vmatpush1.msra.mxu0 0.0
  %484 = vmatprep.subr.mxu0 0.0
  %485 = vmatpush1.msra.mxu0 0.0
  %486 = vmatprep.subr.mxu0 0.0
  %487 = vmatpush1.msra.mxu0 0.0
  %488 = vmatprep.subr.mxu0 0.0
  %489 = vmatpush1.msra.mxu0 0.0
  %490 = vmatprep.subr.mxu0 0.0
  %491 = vmatpush1.msra.mxu0 0.0
  %492 = vmatprep.subr.mxu0 0.0
  %493 = vmatpush1.msra.mxu0 0.0
  %494 = vmatprep.subr.mxu0 0.0
  %495 = vmatpush1.msra.mxu0 0.0
  %496 = vmatprep.subr.mxu0 0.0
  %497 = vmatpush1.msra.mxu0 0.0
  %498 = vmatprep.subr.mxu0 0.0
  %499 = vmatpush1.msra.mxu0 0.0
  %500 = vmatprep.subr.mxu0 0.0
  %501 = vmatpush1.msra.mxu0 0.0
  %502 = vmatprep.subr.mxu0 0.0
  %503 = vmatpush1.msra.mxu0 0.0
  %504 = vmatprep.subr.mxu0 0.0
  %505 = vmatpush1.msra.mxu0 0.0
  %506 = vmatprep.subr.mxu0 0.0
  %507 = vmatpush1.msra.mxu0 0.0
  %508 = vmatprep.subr.mxu0 0.0
  %509 = vmatpush1.msra.mxu0 0.0
  %510 = vmatprep.subr.mxu0 0.0
  %511 = vmatpush1.msra.mxu0 0.0
  %512 = vmatprep.subr.mxu0 0.0
  %513 = vmatpush1.msra.mxu0 0.0
  %514 = vmatprep.subr.mxu0 0.0
  %515 = vmatpush1.msra.mxu0 0.0
  %516 = vmatprep.mubr.f32.mxu0 0.0
  %517 = vmatmul.mubr.f32.gmra.mrb[0].mxu0 %v441
  %v518 = vpop.f32.mrb[0].mxu0
  %v519 = vadd.f32 %v439, %v518
  %v520 = vpop.f32.mrb[0].mxu0
  %521 = vmatprep.mubr.f32.mxu0 0.0
  %522 = vmatmul.mubr.f32.gmra.mrb[0].mxu0 %v444
  %v523 = vpop.f32.mrb[0].mxu0
  %v524 = vadd.f32 %v439, %v523
  %v525 = vpop.f32.mrb[0].mxu0
  %526 = vmatprep.mubr.f32.mxu0 0.0
  %527 = vmatmul.mubr.f32.gmra.mrb[0].mxu0 %v447
  %v528 = vpop.f32.mrb[0].mxu0
  %v529 = vadd.f32 %v439, %v528
  %v530 = vpop.f32.mrb[0].mxu0
  %531 = vmatprep.mubr.f32.mxu0 0.0
  %532 = vmatmul.mubr.f32.gmra.mrb[0].mxu0 %v450
  %v533 = vpop.f32.mrb[0].mxu0
  %v534 = vadd.f32 %v439, %v533
  %v535 = vpop.f32.mrb[0].mxu0
  %536 = vdwg.mxu0
  %v537 = vadd.f32 %v139, %v519
  %v538 = vadd.f32 %v144, %v524
  %v539 = vadd.f32 %v149, %v529
  %v540 = vadd.f32 %v154, %v534
  %v541 = vsel %vm157, %v537, 0.0
  %542 = vadd.xlane.f32.xlu0 %v541
  %v543 = vpop.xlane.xlu0 %542
  %v544 = vsel %vm157, %v538, 0.0
  %545 = vadd.xlane.f32.xlu0 %v544
  %v546 = vpop.xlane.xlu0 %545
  %v547 = vsel %vm157, %v539, 0.0
  %548 = vadd.xlane.f32.xlu0 %v547
  %v549 = vpop.xlane.xlu0 %548
  %v550 = vsel %vm157, %v540, 0.0
  %551 = vadd.xlane.f32.xlu0 %v550
  %v552 = vpop.xlane.xlu0 %551
  %v553 = vmul.f32 %v543, %v170
  %v554 = vmul.f32 %v546, %v170
  %v555 = vmul.f32 %v549, %v170
  %v556 = vmul.f32 %v552, %v170
  %v557 = vsub.f32 %v537, %v553
  %v558 = vsub.f32 %v538, %v554
  %v559 = vsub.f32 %v539, %v555
  %v560 = vsub.f32 %v540, %v556
  %v561 = vmul.f32 %v557, %v557
  %v562 = vmul.f32 %v558, %v558
  %v563 = vmul.f32 %v559, %v559
  %v564 = vmul.f32 %v560, %v560
  %v565 = vsel %vm157, %v561, 0.0
  %566 = vadd.xlane.f32.xlu0 %v565
  %v567 = vpop.xlane.xlu0 %566
  %v568 = vsel %vm157, %v562, 0.0
  %569 = vadd.xlane.f32.xlu0 %v568
  %v570 = vpop.xlane.xlu0 %569
  %v571 = vsel %vm157, %v563, 0.0
  %572 = vadd.xlane.f32.xlu0 %v571
  %v573 = vpop.xlane.xlu0 %572
  %v574 = vsel %vm157, %v564, 0.0
  %575 = vadd.xlane.f32.xlu0 %v574
  %v576 = vpop.xlane.xlu0 %575
  %v577 = vmul.f32 %v567, %v170
  %v578 = vmul.f32 %v570, %v170
  %v579 = vmul.f32 %v573, %v170
  %v580 = vmul.f32 %v576, %v170
  %v581 = vadd.f32 %v577, 1e-05
  %v582 = vadd.f32 %v578, 1e-05
  %v583 = vadd.f32 %v579, 1e-05
  %v584 = vadd.f32 %v580, 1e-05
  %v585 = vrsqrt.pop %v581
  %v586 = vrsqrt.pop %v582
  %v587 = vrsqrt.pop %v583
  %v588 = vrsqrt.pop %v584
  %v589 = vmul.f32 %v557, %v585
  %v590 = vmul.f32 %v558, %v586
  %v591 = vmul.f32 %v559, %v587
  %v592 = vmul.f32 %v560, %v588
  %v593 = vlaneseq
  %v594 = vshrl.u32 %v593, 7
  %v595 = vsub.s32 5, %v594
  %v596 = vrot.slane %v49, %v595
  %v597 = vmul.f32 %v589, %v596
  %v598 = vmul.f32 %v590, %v596
  %v599 = vmul.f32 %v591, %v596
  %v600 = vmul.f32 %v592, %v596
  %v601 = vlaneseq
  %v602 = vshrl.u32 %v601, 7
  %v603 = vsub.s32 6, %v602
  %v604 = vrot.slane %v49, %v603
  %v605 = vadd.f32 %v597, %v604
  %v606 = vadd.f32 %v598, %v604
  %v607 = vadd.f32 %v599, %v604
  %v608 = vadd.f32 %v600, %v604
  %v609 = vlaneseq
  %v610 = vshrl.u32 %v609, 7
  %v611 = vsub.s32 7, %v610
  %v612 = vrot.slane %v49, %v611
  %v614 = vsel %vm157, %v605, 0
  %v617 = vsel %vm157, %v606, 0
  %v620 = vsel %vm157, %v607, 0
  %v623 = vsel %vm157, %v608, 0
  %625 = vmatprep.subr.mxu0 0.0
  %626 = vmatpush1.msra.mxu0 %v45
  %627 = vmatprep.subr.mxu0 0.0
  %628 = vmatpush1.msra.mxu0 %v46
  %629 = vmatprep.subr.mxu0 0.0
  %630 = vmatpush1.msra.mxu0 %v47
  %631 = vmatprep.subr.mxu0 0.0
  %632 = vmatpush1.msra.mxu0 %v48
  %633 = vmatprep.subr.mxu0 0.0
  %634 = vmatpush1.msra.mxu0 0.0
  %635 = vmatprep.subr.mxu0 0.0
  %636 = vmatpush1.msra.mxu0 0.0
  %637 = vmatprep.subr.mxu0 0.0
  %638 = vmatpush1.msra.mxu0 0.0
  %639 = vmatprep.subr.mxu0 0.0
  %640 = vmatpush1.msra.mxu0 0.0
  %641 = vmatprep.subr.mxu0 0.0
  %642 = vmatpush1.msra.mxu0 0.0
  %643 = vmatprep.subr.mxu0 0.0
  %644 = vmatpush1.msra.mxu0 0.0
  %645 = vmatprep.subr.mxu0 0.0
  %646 = vmatpush1.msra.mxu0 0.0
  %647 = vmatprep.subr.mxu0 0.0
  %648 = vmatpush1.msra.mxu0 0.0
  %649 = vmatprep.subr.mxu0 0.0
  %650 = vmatpush1.msra.mxu0 0.0
  %651 = vmatprep.subr.mxu0 0.0
  %652 = vmatpush1.msra.mxu0 0.0
  %653 = vmatprep.subr.mxu0 0.0
  %654 = vmatpush1.msra.mxu0 0.0
  %655 = vmatprep.subr.mxu0 0.0
  %656 = vmatpush1.msra.mxu0 0.0
  %657 = vmatprep.subr.mxu0 0.0
  %658 = vmatpush1.msra.mxu0 0.0
  %659 = vmatprep.subr.mxu0 0.0
  %660 = vmatpush1.msra.mxu0 0.0
  %661 = vmatprep.subr.mxu0 0.0
  %662 = vmatpush1.msra.mxu0 0.0
  %663 = vmatprep.subr.mxu0 0.0
  %664 = vmatpush1.msra.mxu0 0.0
  %665 = vmatprep.subr.mxu0 0.0
  %666 = vmatpush1.msra.mxu0 0.0
  %667 = vmatprep.subr.mxu0 0.0
  %668 = vmatpush1.msra.mxu0 0.0
  %669 = vmatprep.subr.mxu0 0.0
  %670 = vmatpush1.msra.mxu0 0.0
  %671 = vmatprep.subr.mxu0 0.0
  %672 = vmatpush1.msra.mxu0 0.0
  %673 = vmatprep.subr.mxu0 0.0
  %674 = vmatpush1.msra.mxu0 0.0
  %675 = vmatprep.subr.mxu0 0.0
  %676 = vmatpush1.msra.mxu0 0.0
  %677 = vmatprep.subr.mxu0 0.0
  %678 = vmatpush1.msra.mxu0 0.0
  %679 = vmatprep.subr.mxu0 0.0
  %680 = vmatpush1.msra.mxu0 0.0
  %681 = vmatprep.subr.mxu0 0.0
  %682 = vmatpush1.msra.mxu0 0.0
  %683 = vmatprep.subr.mxu0 0.0
  %684 = vmatpush1.msra.mxu0 0.0
  %685 = vmatprep.subr.mxu0 0.0
  %686 = vmatpush1.msra.mxu0 0.0
  %687 = vmatprep.subr.mxu0 0.0
  %688 = vmatpush1.msra.mxu0 0.0
  %689 = vmatprep.mubr.f32.mxu0 0.0
  %690 = vmatmul.mubr.f32.gmra.mrb[0].mxu0 %v614
  %v691 = vpop.f32.mrb[0].mxu0
  %v692 = vadd.f32 %v612, %v691
  %v693 = vpop.f32.mrb[0].mxu0
  %694 = vmatprep.mubr.f32.mxu0 0.0
  %695 = vmatmul.mubr.f32.gmra.mrb[0].mxu0 %v617
  %v696 = vpop.f32.mrb[0].mxu0
  %v697 = vadd.f32 %v612, %v696
  %v698 = vpop.f32.mrb[0].mxu0
  %699 = vmatprep.mubr.f32.mxu0 0.0
  %700 = vmatmul.mubr.f32.gmra.mrb[0].mxu0 %v620
  %v701 = vpop.f32.mrb[0].mxu0
  %v702 = vadd.f32 %v612, %v701
  %v703 = vpop.f32.mrb[0].mxu0
  %704 = vmatprep.mubr.f32.mxu0 0.0
  %705 = vmatmul.mubr.f32.gmra.mrb[0].mxu0 %v623
  %v706 = vpop.f32.mrb[0].mxu0
  %v707 = vadd.f32 %v612, %v706
  %v708 = vpop.f32.mrb[0].mxu0
  %709 = vdwg.mxu0
  %v710 = vmul.f32 %v692, 0.5
  %v711 = vmul.f32 %v697, 0.5
  %v712 = vmul.f32 %v702, 0.5
  %v713 = vmul.f32 %v707, 0.5
  %v714 = vmul.f32 %v692, 0.70710677
  %v715 = vmul.f32 %v697, 0.70710677
  %v716 = vmul.f32 %v702, 0.70710677
  %v717 = vmul.f32 %v707, 0.70710677
  %vm718 = vcmp.ge.f32.partialorder %v714, 0.0
  %vm719 = vcmp.ge.f32.partialorder %v715, 0.0
  %vm720 = vcmp.ge.f32.partialorder %v716, 0.0
  %vm721 = vcmp.ge.f32.partialorder %v717, 0.0
  %v722 = vsel %vm718, 1.0, -1.0
  %v723 = vsel %vm719, 1.0, -1.0
  %v724 = vsel %vm720, 1.0, -1.0
  %v725 = vsel %vm721, 1.0, -1.0
  %v726 = vand.u32 2147483647, %v714
  %v727 = vand.u32 2147483647, %v715
  %v728 = vand.u32 2147483647, %v716
  %v729 = vand.u32 2147483647, %v717
  %v730 = vmul.f32 %v726, 0.3275911
  %v731 = vmul.f32 %v727, 0.3275911
  %v732 = vmul.f32 %v728, 0.3275911
  %v733 = vmul.f32 %v729, 0.3275911
  %v734 = vadd.f32 %v730, 1.0
  %v735 = vadd.f32 %v731, 1.0
  %v736 = vadd.f32 %v732, 1.0
  %v737 = vadd.f32 %v733, 1.0
  %v738 = vrcp.pop %v734
  %v739 = vmul.f32 1.0, %v738
  %v740 = vrcp.pop %v735
  %v741 = vmul.f32 1.0, %v740
  %v742 = vrcp.pop %v736
  %v743 = vmul.f32 1.0, %v742
  %v744 = vrcp.pop %v737
  %v745 = vmul.f32 1.0, %v744
  %v746 = vmul.f32 %v739, 1.0614054
  %v747 = vmul.f32 %v741, 1.0614054
  %v748 = vmul.f32 %v743, 1.0614054
  %v749 = vmul.f32 %v745, 1.0614054
  %v750 = vadd.f32 %v746, -1.4531521
  %v751 = vadd.f32 %v747, -1.4531521
  %v752 = vadd.f32 %v748, -1.4531521
  %v753 = vadd.f32 %v749, -1.4531521
  %v754 = vmul.f32 %v750, %v739
  %v755 = vmul.f32 %v751, %v741
  %v756 = vmul.f32 %v752, %v743
  %v757 = vmul.f32 %v753, %v745
  %v758 = vadd.f32 %v754, 1.4214138
  %v759 = vadd.f32 %v755, 1.4214138
  %v760 = vadd.f32 %v756, 1.4214138
  %v761 = vadd.f32 %v757, 1.4214138
  %v762 = vmul.f32 %v758, %v739
  %v763 = vmul.f32 %v759, %v741
  %v764 = vmul.f32 %v760, %v743
  %v765 = vmul.f32 %v761, %v745
  %v766 = vadd.f32 %v762, -0.28449672
  %v767 = vadd.f32 %v763, -0.28449672
  %v768 = vadd.f32 %v764, -0.28449672
  %v769 = vadd.f32 %v765, -0.28449672
  %v770 = vmul.f32 %v766, %v739
  %v771 = vmul.f32 %v767, %v741
  %v772 = vmul.f32 %v768, %v743
  %v773 = vmul.f32 %v769, %v745
  %v774 = vadd.f32 %v770, 0.2548296
  %v775 = vadd.f32 %v771, 0.2548296
  %v776 = vadd.f32 %v772, 0.2548296
  %v777 = vadd.f32 %v773, 0.2548296
  %v778 = vmul.f32 %v774, %v739
  %v779 = vmul.f32 %v775, %v741
  %v780 = vmul.f32 %v776, %v743
  %v781 = vmul.f32 %v777, %v745
  %v782 = vsub.f32 0.0, %v726
  %v783 = vsub.f32 0.0, %v727
  %v784 = vsub.f32 0.0, %v728
  %v785 = vsub.f32 0.0, %v729
  %v786 = vmul.f32 %v782, %v726
  %v787 = vmul.f32 %v783, %v727
  %v788 = vmul.f32 %v784, %v728
  %v789 = vmul.f32 %v785, %v729
  %v790 = vmul.f32 %v786, 1.442695
  %v791 = vpow.pop %v790
  %v792 = vmul.f32 %v787, 1.442695
  %v793 = vpow.pop %v792
  %v794 = vmul.f32 %v788, 1.442695
  %v795 = vpow.pop %v794
  %v796 = vmul.f32 %v789, 1.442695
  %v797 = vpow.pop %v796
  %v798 = vmul.f32 %v778, %v791
  %v799 = vmul.f32 %v779, %v793
  %v800 = vmul.f32 %v780, %v795
  %v801 = vmul.f32 %v781, %v797
  %v802 = vsub.f32 1.0, %v798
  %v803 = vsub.f32 1.0, %v799
  %v804 = vsub.f32 1.0, %v800
  %v805 = vsub.f32 1.0, %v801
  %v806 = vmul.f32 %v722, %v802
  %v807 = vmul.f32 %v723, %v803
  %v808 = vmul.f32 %v724, %v804
  %v809 = vmul.f32 %v725, %v805
  %v810 = vadd.f32 %v806, 1.0
  %v811 = vadd.f32 %v807, 1.0
  %v812 = vadd.f32 %v808, 1.0
  %v813 = vadd.f32 %v809, 1.0
  %v814 = vmul.f32 %v710, %v810
  %v815 = vmul.f32 %v711, %v811
  %v816 = vmul.f32 %v712, %v812
  %v817 = vmul.f32 %v713, %v813
  %v818 = vlaneseq
  %v819 = vshrl.u32 %v818, 7
  %v820 = vsub.s32 0, %v819
  %v821 = vrot.slane %v50, %v820
  %v823 = vsel %vm59, %v814, 0
  %v826 = vsel %vm59, %v815, 0
  %v829 = vsel %vm59, %v816, 0
  %v832 = vsel %vm59, %v817, 0
  %834 = vmatprep.subr.mxu0 0.0
  %835 = vmatpush1.msra.mxu0 %v33
  %836 = vmatprep.subr.mxu0 0.0
  %837 = vmatpush1.msra.mxu0 %v34
  %838 = vmatprep.subr.mxu0 0.0
  %839 = vmatpush1.msra.mxu0 %v35
  %840 = vmatprep.subr.mxu0 0.0
  %841 = vmatpush1.msra.mxu0 %v36
  %842 = vmatprep.subr.mxu0 0.0
  %843 = vmatpush1.msra.mxu0 %v37
  %844 = vmatprep.subr.mxu0 0.0
  %845 = vmatpush1.msra.mxu0 %v38
  %846 = vmatprep.subr.mxu0 0.0
  %847 = vmatpush1.msra.mxu0 %v39
  %848 = vmatprep.subr.mxu0 0.0
  %849 = vmatpush1.msra.mxu0 %v40
  %850 = vmatprep.subr.mxu0 0.0
  %851 = vmatpush1.msra.mxu0 0.0
  %852 = vmatprep.subr.mxu0 0.0
  %853 = vmatpush1.msra.mxu0 0.0
  %854 = vmatprep.subr.mxu0 0.0
  %855 = vmatpush1.msra.mxu0 0.0
  %856 = vmatprep.subr.mxu0 0.0
  %857 = vmatpush1.msra.mxu0 0.0
  %858 = vmatprep.subr.mxu0 0.0
  %859 = vmatpush1.msra.mxu0 0.0
  %860 = vmatprep.subr.mxu0 0.0
  %861 = vmatpush1.msra.mxu0 0.0
  %862 = vmatprep.subr.mxu0 0.0
  %863 = vmatpush1.msra.mxu0 0.0
  %864 = vmatprep.subr.mxu0 0.0
  %865 = vmatpush1.msra.mxu0 0.0
  %866 = vmatprep.subr.mxu0 0.0
  %867 = vmatpush1.msra.mxu0 0.0
  %868 = vmatprep.subr.mxu0 0.0
  %869 = vmatpush1.msra.mxu0 0.0
  %870 = vmatprep.subr.mxu0 0.0
  %871 = vmatpush1.msra.mxu0 0.0
  %872 = vmatprep.subr.mxu0 0.0
  %873 = vmatpush1.msra.mxu0 0.0
  %874 = vmatprep.subr.mxu0 0.0
  %875 = vmatpush1.msra.mxu0 0.0
  %876 = vmatprep.subr.mxu0 0.0
  %877 = vmatpush1.msra.mxu0 0.0
  %878 = vmatprep.subr.mxu0 0.0
  %879 = vmatpush1.msra.mxu0 0.0
  %880 = vmatprep.subr.mxu0 0.0
  %881 = vmatpush1.msra.mxu0 0.0
  %882 = vmatprep.subr.mxu0 0.0
  %883 = vmatpush1.msra.mxu0 0.0
  %884 = vmatprep.subr.mxu0 0.0
  %885 = vmatpush1.msra.mxu0 0.0
  %886 = vmatprep.subr.mxu0 0.0
  %887 = vmatpush1.msra.mxu0 0.0
  %888 = vmatprep.subr.mxu0 0.0
  %889 = vmatpush1.msra.mxu0 0.0
  %890 = vmatprep.subr.mxu0 0.0
  %891 = vmatpush1.msra.mxu0 0.0
  %892 = vmatprep.subr.mxu0 0.0
  %893 = vmatpush1.msra.mxu0 0.0
  %894 = vmatprep.subr.mxu0 0.0
  %895 = vmatpush1.msra.mxu0 0.0
  %896 = vmatprep.subr.mxu0 0.0
  %897 = vmatpush1.msra.mxu0 0.0
  %898 = vmatprep.mubr.f32.mxu0 0.0
  %899 = vmatmul.mubr.f32.gmra.mrb[0].mxu0 %v823
  %v900 = vpop.f32.mrb[0].mxu0
  %v901 = vadd.f32 %v821, %v900
  %v902 = vpop.f32.mrb[0].mxu0
  %903 = vmatprep.mubr.f32.mxu0 0.0
  %904 = vmatmul.mubr.f32.gmra.mrb[0].mxu0 %v826
  %v905 = vpop.f32.mrb[0].mxu0
  %v906 = vadd.f32 %v821, %v905
  %v907 = vpop.f32.mrb[0].mxu0
  %908 = vmatprep.mubr.f32.mxu0 0.0
  %909 = vmatmul.mubr.f32.gmra.mrb[0].mxu0 %v829
  %v910 = vpop.f32.mrb[0].mxu0
  %v911 = vadd.f32 %v821, %v910
  %v912 = vpop.f32.mrb[0].mxu0
  %913 = vmatprep.mubr.f32.mxu0 0.0
  %914 = vmatmul.mubr.f32.gmra.mrb[0].mxu0 %v832
  %v915 = vpop.f32.mrb[0].mxu0
  %v916 = vadd.f32 %v821, %v915
  %v917 = vpop.f32.mrb[0].mxu0
  %918 = vdwg.mxu0
  %v919 = vadd.f32 %v537, %v901
  %v920 = vadd.f32 %v538, %v906
  %v921 = vadd.f32 %v539, %v911
  %v922 = vadd.f32 %v540, %v916
  %923 = vst.msk [vmem:[%s4] sm:$0xff] %vm157, %v919
  %924 = vst.msk [vmem:[%s4 + $0x8] sm:$0xff] %vm157, %v920
  %925 = vst.msk [vmem:[%s4 + $0x10] sm:$0xff] %vm157, %v921
  %926 = vst.msk [vmem:[%s4 + $0x18] sm:$0xff] %vm157, %v922
  // Predicated region
  $region18: #{mixer_forward.1} parent=0 // pred_check
    _
  $region19: #{mixer_forward.1} parent=0 // pred_check_branch
    %928 = sbr.rel (0) target = $region21
  $region20: #{mixer_forward.1} parent=0 // pred_region
    _
  $region21: #{mixer_forward.1} parent=0 // pred_fallthru
    _
  // Predicated region
  $region22: #{mixer_forward.1} parent=0 // pred_check
    _
  $region23: #{mixer_forward.1} parent=0 // pred_check_branch
    %930 = sbr.rel (0) target = $region25
  $region24: #{mixer_forward.1} parent=0 // pred_region
    _
  $region25: #{mixer_forward.1} parent=0 // pred_fallthru
    _

</llo_original>
